<compile_context>
chip_gen: v5e
topology: v5e:2x2
jax: 0.10.0
libtpu: 0.0.40
codegen_flags: <defaults>
</compile_context>

<pallas_src>
import functools

import jax
import jax.numpy as jnp
from jax.experimental import pallas as pl
from jax.experimental.pallas import tpu as pltpu


def _vmem_capacity_bytes():
    """Physical per-core VMEM; conservative 64 MiB (v7x) fallback."""
    try:
        info = pltpu.get_tpu_info()
        for name in ("vmem_capacity_bytes", "vmem_size_bytes", "vmem_bytes"):
            val = getattr(info, name, None)
            if val:
                return int(val)
    except Exception:
        pass
    return 64 * 1024 * 1024


def _choose_tile_h(C, H, W, itemsize, sub, target_bytes, hard_bytes):
    """Largest H-tile (multiple of `sub` dividing H) with tile bytes <= ~target."""
    row_bytes = max(1, C * W * itemsize)
    cap_rows = max(1, target_bytes // row_bytes)
    hard_rows = max(1, hard_bytes // row_bytes)
    if H <= cap_rows:
        return H
    aligned = [t for t in range(sub, H, sub) if H % t == 0]
    under = [t for t in aligned if t <= cap_rows]
    if under:
        return max(under)
    small = [t for t in aligned if t <= hard_rows]
    if small:
        return min(small)        # smallest aligned sub-tile; over target, fits VMEM
    if H <= hard_rows:
        return H                 # no aligned divisor (e.g. odd H) but whole H fits
    # No aligned divisor fits the per-generation VMEM budget: use any divisor that
    # does (unaligned second-minor block: slower, but correct and VMEM-safe).
    divs = [t for t in range(1, H + 1) if H % t == 0 and t <= hard_rows]
    # TODO(synk): for pathological H (huge prime with enormous C*W rows) switch to
    # a cdiv grid with a masked remainder tile instead of divisor-based tiling.
    return max(divs) if divs else H


def _hybrid_sums_kernel(y_ref, gt_ref, out_ref, *scratch_refs,
                        use_roll, spatial_tv, spectral_tv, acc_rows):
    """Accumulates per-b folded partial-sum planes into the resident out block.

    Block views (batch dim squeezed):
      y_ref, gt_ref : (C, th, W)
      out_ref       : (NP, acc_rows, W) f32 -- resident accumulator for this b
      scratch       : (carry (C, 1, W) f32,) iff spatial_tv
    Plane order: [sum_c |y-gt|] + [h_tv, w_tv] (spatial) + [c_tv] (spectral).
    """
    h = pl.program_id(1)
    C, th, W = y_ref.shape
    carry_ref = scratch_refs[0] if spatial_tv else None

    y = y_ref[...]
    gt = gt_ref[...]
    if y.dtype != jnp.float32:
        y = y.astype(jnp.float32)
    if gt.dtype != jnp.float32:
        gt = gt.astype(jnp.float32)

    if spatial_tv:
        @pl.when(h == 0)
        def _seed_carry():
            # Seed with this tile's own first row so the tile-0 h-TV boundary
            # diff is identically zero -> no (h > 0) select in the hot path.
            carry_ref[...] = y[:, 0:1, :]

    def _fold(plane):  # (th, W) -> (acc_rows, W): pure VPU adds, layout-preserving
        if acc_rows == th:
            return plane
        return jnp.sum(plane.reshape(th // acc_rows, acc_rows, W), axis=0)

    # --- L1 fidelity plane: sum over C of |y - gt| --------------------------------
    planes = [_fold(jnp.sum(jnp.abs(y - gt), axis=0))]

    # --- spatial TV (height & width directions) -----------------------------------
    if spatial_tv:
        carry = carry_ref[...]                      # (C, 1, W): prev tile's last row
        db = y[:, 0:1, :] - carry                   # zero on the first H tile
        brow = jnp.sum(db * db, axis=0)             # (1, W) boundary h-TV row

        if use_roll:
            # Aligned path: XLU rotations; masks only on the channel-summed
            # (th, W) planes (not on the full (C, th, W) tensors).
            row2 = jax.lax.broadcasted_iota(jnp.int32, (th, W), 0)
            col2 = jax.lax.broadcasted_iota(jnp.int32, (th, W), 1)

            dh = y - pltpu.roll(y, shift=1, axis=1)   # row 0 is wrap-around garbage
            plane_h = jnp.sum(dh * dh, axis=0)
            plane_h = jnp.where(row2 == 0, brow, plane_h)

            dw = y - pltpu.roll(y, shift=1, axis=2)   # col 0 is wrap-around garbage
            plane_w = jnp.where(col2 > 0, jnp.sum(dw * dw, axis=0), 0.0)
        else:
            # Unaligned fallback (tiny W): slice-pair diffs; perf-irrelevant shapes.
            if th > 1:
                dh_in = y[:, 1:, :] - y[:, :-1, :]                    # (C, th-1, W)
                plane_h = jnp.concatenate(
                    [brow, jnp.sum(dh_in * dh_in, axis=0)], axis=0)   # (th, W)
            else:
                plane_h = brow
            if W > 1:
                dw = y[:, :, 1:] - y[:, :, :-1]                       # (C, th, W-1)
                plane_w = jnp.concatenate(
                    [jnp.zeros((th, 1), jnp.float32),
                     jnp.sum(dw * dw, axis=0)], axis=1)               # (th, W)
            else:
                plane_w = jnp.zeros((th, W), jnp.float32)

        planes.append(_fold(plane_h))
        planes.append(_fold(plane_w))
        # Carry this tile's last row for the next tile's boundary term.
        carry_ref[...] = y[:, th - 1:th, :]

    # --- spectral TV (channel direction). C is a major axis: slicing is free. ----
    if spectral_tv:
        if C > 1:
            dc = y[1:, :, :] - y[:-1, :, :]
            plane_c = jnp.sum(dc * dc, axis=0)
        else:
            plane_c = jnp.zeros((th, W), jnp.float32)
        planes.append(_fold(plane_c))

    # --- first-step overwrite / later accumulate (no zero-init pass) -------------
    @pl.when(h == 0)
    def _store():
        for i, p in enumerate(planes):
            out_ref[i] = p

    @pl.when(h > 0)
    def _accum():
        for i, p in enumerate(planes):
            out_ref[i] += p


def _tv_partial_sums(y, gt, spatial_tv, spectral_tv, tile_h=None):
    """Raw sums, shape (NP,) f32: [sum|y-gt|] + [h_tv, w_tv]? + [c_tv]? per flags."""
    B, C, H, W = y.shape
    itemsize = jnp.dtype(y.dtype).itemsize
    sub = max(8, 32 // max(1, itemsize))        # f32: 8, bf16: 16, int8/fp8: 32

    vmem_cap = _vmem_capacity_bytes()
    # Generation-aware: bigger tiles on 128-MiB-VMEM parts (v5e/v6e), ~2 MiB tiles
    # and a <= 3/4-of-physical scoped limit on v7x (64 MiB physical).
    target_bytes = (4 * 1024 * 1024 if vmem_cap >= 96 * 1024 * 1024
                    else 2 * 1024 * 1024)
    if tile_h is None:
        th = _choose_tile_h(C, H, W, itemsize, sub, target_bytes, vmem_cap // 8)
    else:
        th = int(tile_h)
    assert H % th == 0, (th, H)

    acc_rows = 8 if th % 8 == 0 else th
    # Roll path only on fully lane/sublane-aligned blocks.
    # TODO(synk): extend to any W >= 128 via lane masking / wrapper-side padding.
    use_roll = (W % 128 == 0) and (th % 8 == 0)
    n_planes = 1 + (2 if spatial_tv else 0) + (1 if spectral_tv else 0)

    in_tile = C * th * W * itemsize
    out_tile = n_planes * acc_rows * W * 4
    carry_bytes = C * max(W, 128) * 4
    needed = 2 * 2 * in_tile + 2 * out_tile + 2 * carry_bytes   # 2 inputs x 2 bufs
    vmem_limit = int(min(max(2 * needed, 32 * 1024 * 1024), (vmem_cap * 3) // 4))

    kernel = functools.partial(_hybrid_sums_kernel, use_roll=use_roll,
                               spatial_tv=spatial_tv, spectral_tv=spectral_tv,
                               acc_rows=acc_rows)
    scratch = [pltpu.VMEM((C, 1, W), jnp.float32)] if spatial_tv else []

    # TODO(synk): pipeline_mode=pl.Buffered(3) on the input specs (v7x sweep) and a
    # second parallel grid axis (split H into halves) when B == 1 on v7x.
    grid_spec = pltpu.PrefetchScalarGridSpec(
        num_scalar_prefetch=0,
        grid=(B, H // th),
        in_specs=[
            pl.BlockSpec((None, C, th, W), lambda b, t: (b, 0, t, 0)),
            pl.BlockSpec((None, C, th, W), lambda b, t: (b, 0, t, 0)),
        ],
        out_specs=pl.BlockSpec((None, n_planes, acc_rows, W),
                               lambda b, t: (b, 0, 0, 0)),
        scratch_shapes=scratch,
    )

    partials = pl.pallas_call(
        kernel,
        out_shape=jax.ShapeDtypeStruct((B, n_planes, acc_rows, W), jnp.float32),
        grid_spec=grid_spec,
        compiler_params=pltpu.CompilerParams(
            dimension_semantics=("parallel", "arbitrary"),
            vmem_limit_bytes=vmem_limit,
        ),
    )(y, gt)

    # Tiny final reduction (outside the kernel hot loop), th/8x smaller than rev 2.
    return jnp.sum(partials, axis=(0, 2, 3))


@functools.partial(jax.jit,
                   static_argnames=("lamd", "spatial_tv", "spectral_tv", "tile_h"))
def hybrid_loss(y, gt, *, lamd=0.1, spatial_tv=False, spectral_tv=False,
                tile_h=None):
    """JAX/Pallas equivalent of HybridLoss(lamd, spatial_tv, spectral_tv)(y, gt).

    y, gt: (B, C, H, W) arrays (NCHW, matching the PyTorch module).
    """
    B, C, H, W = y.shape
    sums = _tv_partial_sums(y, gt, spatial_tv, spectral_tv, tile_h)

    # L1Loss (default reduction='mean')
    total = sums[0] / jnp.float32(B * C * H * W)

    idx = 1
    if spatial_tv:
        h_tv, w_tv = sums[idx], sums[idx + 1]
        idx += 2
        # NOTE: counts can be 0 when H == 1 or W == 1, mirroring the PyTorch 0/0.
        count_h = C * (H - 1) * W
        count_w = C * H * (W - 1)
        total = total + jnp.float32(0.001) * (h_tv / count_h + w_tv / count_w) / B
    if spectral_tv:
        c_tv = sums[idx]
        # NOTE: if C == 1 this divides by zero, mirroring the PyTorch original.
        count_c = (C - 1) * H * W
        total = total + jnp.float32(0.001) * 2.0 * (c_tv / count_c) / B
    # NOTE: self.lamd is stored by HybridLoss but unused in its forward().
    return total


def _reference(y, gt, spatial_tv=True, spectral_tv=True):
    """Pure-JAX reference for verification."""
    B, C, H, W = y.shape
    loss = jnp.mean(jnp.abs(y - gt))
    if spatial_tv:
        h_tv = jnp.sum((y[:, :, 1:, :] - y[:, :, :-1, :]) ** 2)
        w_tv = jnp.sum((y[:, :, :, 1:] - y[:, :, :, :-1]) ** 2)
        loss = loss + 0.001 * (h_tv / (C * (H - 1) * W) + w_tv / (C * H * (W - 1))) / B
    if spectral_tv:
        c_tv = jnp.sum((y[:, 1:, :, :] - y[:, :-1, :, :]) ** 2)
        loss = loss + 0.001 * 2.0 * (c_tv / ((C - 1) * H * W)) / B
    return loss


if __name__ == "__main__":
    key = jax.random.PRNGKey(0)
    k1, k2 = jax.random.split(key)

    B, C, H, W = 2, 4, 16, 16
    y16 = jax.random.normal(k1, (B, C, H, W), dtype=jnp.float32)
    g16 = jax.random.normal(k2, (B, C, H, W), dtype=jnp.float32)

    # 1) Full loss, auto tile (single H tile), unaligned fallback path (W=16).
    out = jax.block_until_ready(hybrid_loss(y16, g16, lamd=0.1,
                                            spatial_tv=True, spectral_tv=True))
    ref = _reference(y16, g16, True, True)
    assert jnp.allclose(out, ref, rtol=2e-5, atol=1e-5), (out, ref)

    # 2) Same, forced H-tiling: exercises the cross-tile carry (fallback path).
    out = jax.block_until_ready(hybrid_loss(y16, g16, lamd=0.1, spatial_tv=True,
                                            spectral_tv=True, tile_h=8))
    assert jnp.allclose(out, ref, rtol=2e-5, atol=1e-5), (out, ref)

    # 3) Lane-aligned shape (W=128) with H-tiling: exercises the pltpu.roll path,
    #    the carry splice at row 0 and the folded (NP, 8, W) accumulator.
    k3, k4 = jax.random.split(jax.random.fold_in(key, 1))
    y128 = jax.random.normal(k3, (2, 4, 16, 128), dtype=jnp.float32)
    g128 = jax.random.normal(k4, (2, 4, 16, 128), dtype=jnp.float32)
    out = jax.block_until_ready(hybrid_loss(y128, g128, lamd=0.1, spatial_tv=True,
                                            spectral_tv=True, tile_h=8))
    ref128 = _reference(y128, g128, True, True)
    assert jnp.allclose(out, ref128, rtol=2e-5, atol=1e-5), (out, ref128)

    # 4) Spatial-only (3-plane accumulator), aligned path, auto tile (single tile).
    out = jax.block_until_ready(hybrid_loss(y128, g128, spatial_tv=True))
    ref_sp = _reference(y128, g128, True, False)
    assert jnp.allclose(out, ref_sp, rtol=2e-5, atol=1e-5), (out, ref_sp)

    # 5) Module defaults (TV terms disabled): single-plane pure-L1 kernel.
    out_l1 = jax.block_until_ready(hybrid_loss(y16, g16))
    ref_l1 = jnp.mean(jnp.abs(y16 - g16))
    assert jnp.allclose(out_l1, ref_l1, rtol=2e-5, atol=1e-6), (out_l1, ref_l1)

    print("KERNEL_OK")
</pallas_src>

<mosaic_0001>
module attributes {stable_mosaic.version = 11 : i64} {
  func.func @_hybrid_sums_kernel(%arg0: i32, %arg1: i32, %arg2: memref<1x4x16x16xf32, #tpu.memory_space<vmem>>, %arg3: memref<1x4x16x16xf32, #tpu.memory_space<vmem>>, %arg4: memref<1x4x8x16xf32, #tpu.memory_space<vmem>>, %arg5: memref<4x1x16xf32, #tpu.memory_space<vmem>>) attributes {dimension_semantics = [#tpu.dimension_semantics<parallel>, #tpu.dimension_semantics<arbitrary>], iteration_bounds = array<i64: 2, 1>, scalar_prefetch = 0 : i64, scratch_operands = 1 : i64, tpu.core_type = #tpu.core_type<tc>, window_params = [{transform_indices = @transform_0, window_bounds = array<i64: 1, 4, 16, 16>}, {transform_indices = @transform_1, window_bounds = array<i64: 1, 4, 16, 16>}, {transform_indices = @transform_2, window_bounds = array<i64: 1, 4, 8, 16>}]} {
    %c0 = arith.constant 0 : index
    %c0_0 = arith.constant 0 : index
    %c0_1 = arith.constant 0 : index
    %c0_2 = arith.constant 0 : index
    %0 = vector.load %arg2[%c0, %c0_0, %c0_1, %c0_2] : memref<1x4x16x16xf32, #tpu.memory_space<vmem>>, vector<1x4x16x16xf32>
    %1 = vector.shape_cast %0 : vector<1x4x16x16xf32> to vector<4x16x16xf32>
    %c0_3 = arith.constant 0 : index
    %c0_4 = arith.constant 0 : index
    %c0_5 = arith.constant 0 : index
    %c0_6 = arith.constant 0 : index
    %2 = vector.load %arg3[%c0_3, %c0_4, %c0_5, %c0_6] : memref<1x4x16x16xf32, #tpu.memory_space<vmem>>, vector<1x4x16x16xf32>
    %3 = vector.shape_cast %2 : vector<1x4x16x16xf32> to vector<4x16x16xf32>
    %c0_i32 = arith.constant 0 : i32
    %4 = arith.cmpi eq, %arg1, %c0_i32 : i32
    %5 = arith.extui %4 : i1 to i32
    %c0_i32_7 = arith.constant 0 : i32
    %6 = arith.cmpi ne, %5, %c0_i32_7 : i32
    scf.if %6 {
      %49 = vector.extract_strided_slice %1 {offsets = [0, 0, 0], sizes = [4, 1, 16], strides = [1, 1, 1]} : vector<4x16x16xf32> to vector<4x1x16xf32>
      %c0_27 = arith.constant 0 : index
      %c0_28 = arith.constant 0 : index
      %c0_29 = arith.constant 0 : index
      %50 = vector.load %arg5[%c0_27, %c0_28, %c0_29] : memref<4x1x16xf32, #tpu.memory_space<vmem>>, vector<4x1x16xf32>
      tpu.vector_store %arg5[%c0_27, %c0_28, %c0_29], %49 {strides = array<i32>} : memref<4x1x16xf32, #tpu.memory_space<vmem>>, vector<4x1x16xf32>,
    } else {
    }
    %7 = arith.subf %1, %3 : vector<4x16x16xf32>
    %8 = math.absf %7 : vector<4x16x16xf32>
    %cst = arith.constant dense<0.000000e+00> : vector<16x16xf32>
    %9 = vector.multi_reduction <add>, %8, %cst [0] : vector<4x16x16xf32> to vector<16x16xf32>
    %10 = vector.shape_cast %9 : vector<16x16xf32> to vector<2x8x16xf32>
    %cst_8 = arith.constant dense<0.000000e+00> : vector<8x16xf32>
    %11 = vector.multi_reduction <add>, %10, %cst_8 [0] : vector<2x8x16xf32> to vector<8x16xf32>
    %c0_9 = arith.constant 0 : index
    %c0_10 = arith.constant 0 : index
    %c0_11 = arith.constant 0 : index
    %12 = vector.load %arg5[%c0_9, %c0_10, %c0_11] : memref<4x1x16xf32, #tpu.memory_space<vmem>>, vector<4x1x16xf32>
    %13 = vector.extract_strided_slice %1 {offsets = [0, 0, 0], sizes = [4, 1, 16], strides = [1, 1, 1]} : vector<4x16x16xf32> to vector<4x1x16xf32>
    %14 = arith.subf %13, %12 : vector<4x1x16xf32>
    %15 = arith.mulf %14, %14 : vector<4x1x16xf32>
    %cst_12 = arith.constant dense<0.000000e+00> : vector<1x16xf32>
    %16 = vector.multi_reduction <add>, %15, %cst_12 [0] : vector<4x1x16xf32> to vector<1x16xf32>
    %17 = vector.extract_strided_slice %1 {offsets = [0, 1, 0], sizes = [4, 15, 16], strides = [1, 1, 1]} : vector<4x16x16xf32> to vector<4x15x16xf32>
    %18 = vector.extract_strided_slice %1 {offsets = [0, 0, 0], sizes = [4, 15, 16], strides = [1, 1, 1]} : vector<4x16x16xf32> to vector<4x15x16xf32>
    %19 = arith.subf %17, %18 : vector<4x15x16xf32>
    %20 = arith.mulf %19, %19 : vector<4x15x16xf32>
    %cst_13 = arith.constant dense<0.000000e+00> : vector<15x16xf32>
    %21 = vector.multi_reduction <add>, %20, %cst_13 [0] : vector<4x15x16xf32> to vector<15x16xf32>
    %22 = tpu.concatenate %16, %21 in 0 : vector<1x16xf32>, vector<15x16xf32> -> vector<16x16xf32>
    %23 = vector.extract_strided_slice %1 {offsets = [0, 0, 1], sizes = [4, 16, 15], strides = [1, 1, 1]} : vector<4x16x16xf32> to vector<4x16x15xf32>
    %24 = vector.extract_strided_slice %1 {offsets = [0, 0, 0], sizes = [4, 16, 15], strides = [1, 1, 1]} : vector<4x16x16xf32> to vector<4x16x15xf32>
    %25 = arith.subf %23, %24 : vector<4x16x15xf32>
    %cst_14 = arith.constant 0.000000e+00 : f32
    %26 = vector.broadcast %cst_14 : f32 to vector<16x1xf32>
    %27 = arith.mulf %25, %25 : vector<4x16x15xf32>
    %cst_15 = arith.constant dense<0.000000e+00> : vector<16x15xf32>
    %28 = vector.multi_reduction <add>, %27, %cst_15 [0] : vector<4x16x15xf32> to vector<16x15xf32>
    %29 = tpu.concatenate %26, %28 in 1 : vector<16x1xf32>, vector<16x15xf32> -> vector<16x16xf32>
    %30 = vector.shape_cast %22 : vector<16x16xf32> to vector<2x8x16xf32>
    %cst_16 = arith.constant dense<0.000000e+00> : vector<8x16xf32>
    %31 = vector.multi_reduction <add>, %30, %cst_16 [0] : vector<2x8x16xf32> to vector<8x16xf32>
    %32 = vector.shape_cast %29 : vector<16x16xf32> to vector<2x8x16xf32>
    %cst_17 = arith.constant dense<0.000000e+00> : vector<8x16xf32>
    %33 = vector.multi_reduction <add>, %32, %cst_17 [0] : vector<2x8x16xf32> to vector<8x16xf32>
    %34 = vector.extract_strided_slice %1 {offsets = [0, 15, 0], sizes = [4, 1, 16], strides = [1, 1, 1]} : vector<4x16x16xf32> to vector<4x1x16xf32>
    %c0_18 = arith.constant 0 : index
    %c0_19 = arith.constant 0 : index
    %c0_20 = arith.constant 0 : index
    %35 = vector.load %arg5[%c0_18, %c0_19, %c0_20] : memref<4x1x16xf32, #tpu.memory_space<vmem>>, vector<4x1x16xf32>
    tpu.vector_store %arg5[%c0_18, %c0_19, %c0_20], %34 {strides = array<i32>} : memref<4x1x16xf32, #tpu.memory_space<vmem>>, vector<4x1x16xf32>,
    %36 = vector.extract_strided_slice %1 {offsets = [1, 0, 0], sizes = [3, 16, 16], strides = [1, 1, 1]} : vector<4x16x16xf32> to vector<3x16x16xf32>
    %37 = vector.extract_strided_slice %1 {offsets = [0, 0, 0], sizes = [3, 16, 16], strides = [1, 1, 1]} : vector<4x16x16xf32> to vector<3x16x16xf32>
    %38 = arith.subf %36, %37 : vector<3x16x16xf32>
    %39 = arith.mulf %38, %38 : vector<3x16x16xf32>
    %cst_21 = arith.constant dense<0.000000e+00> : vector<16x16xf32>
    %40 = vector.multi_reduction <add>, %39, %cst_21 [0] : vector<3x16x16xf32> to vector<16x16xf32>
    %41 = vector.shape_cast %40 : vector<16x16xf32> to vector<2x8x16xf32>
    %cst_22 = arith.constant dense<0.000000e+00> : vector<8x16xf32>
    %42 = vector.multi_reduction <add>, %41, %cst_22 [0] : vector<2x8x16xf32> to vector<8x16xf32>
    %c0_i32_23 = arith.constant 0 : i32
    %43 = arith.cmpi eq, %arg1, %c0_i32_23 : i32
    %44 = arith.extui %43 : i1 to i32
    %c0_i32_24 = arith.constant 0 : i32
    %45 = arith.cmpi ne, %44, %c0_i32_24 : i32
    scf.if %45 {
      %c0_27 = arith.constant 0 : index
      %c0_28 = arith.constant 0 : index
      %c0_29 = arith.constant 0 : index
      %c0_30 = arith.constant 0 : index
      %49 = vector.load %arg4[%c0_27, %c0_28, %c0_29, %c0_30] : memref<1x4x8x16xf32, #tpu.memory_space<vmem>>, vector<1x1x8x16xf32>
      %50 = vector.shape_cast %49 : vector<1x1x8x16xf32> to vector<8x16xf32>
      %51 = vector.shape_cast %11 : vector<8x16xf32> to vector<1x1x8x16xf32>
      tpu.vector_store %arg4[%c0_27, %c0_28, %c0_29, %c0_30], %51 {strides = array<i32>} : memref<1x4x8x16xf32, #tpu.memory_space<vmem>>, vector<1x1x8x16xf32>,
      %c0_31 = arith.constant 0 : index
      %c1 = arith.constant 1 : index
      %c0_32 = arith.constant 0 : index
      %c0_33 = arith.constant 0 : index
      %52 = vector.load %arg4[%c0_31, %c1, %c0_32, %c0_33] : memref<1x4x8x16xf32, #tpu.memory_space<vmem>>, vector<1x1x8x16xf32>
      %53 = vector.shape_cast %52 : vector<1x1x8x16xf32> to vector<8x16xf32>
      %54 = vector.shape_cast %31 : vector<8x16xf32> to vector<1x1x8x16xf32>
      tpu.vector_store %arg4[%c0_31, %c1, %c0_32, %c0_33], %54 {strides = array<i32>} : memref<1x4x8x16xf32, #tpu.memory_space<vmem>>, vector<1x1x8x16xf32>,
      %c0_34 = arith.constant 0 : index
      %c2 = arith.constant 2 : index
      %c0_35 = arith.constant 0 : index
      %c0_36 = arith.constant 0 : index
      %55 = vector.load %arg4[%c0_34, %c2, %c0_35, %c0_36] : memref<1x4x8x16xf32, #tpu.memory_space<vmem>>, vector<1x1x8x16xf32>
      %56 = vector.shape_cast %55 : vector<1x1x8x16xf32> to vector<8x16xf32>
      %57 = vector.shape_cast %33 : vector<8x16xf32> to vector<1x1x8x16xf32>
      tpu.vector_store %arg4[%c0_34, %c2, %c0_35, %c0_36], %57 {strides = array<i32>} : memref<1x4x8x16xf32, #tpu.memory_space<vmem>>, vector<1x1x8x16xf32>,
      %c0_37 = arith.constant 0 : index
      %c3 = arith.constant 3 : index
      %c0_38 = arith.constant 0 : index
      %c0_39 = arith.constant 0 : index
      %58 = vector.load %arg4[%c0_37, %c3, %c0_38, %c0_39] : memref<1x4x8x16xf32, #tpu.memory_space<vmem>>, vector<1x1x8x16xf32>
      %59 = vector.shape_cast %58 : vector<1x1x8x16xf32> to vector<8x16xf32>
      %60 = vector.shape_cast %42 : vector<8x16xf32> to vector<1x1x8x16xf32>
      tpu.vector_store %arg4[%c0_37, %c3, %c0_38, %c0_39], %60 {strides = array<i32>} : memref<1x4x8x16xf32, #tpu.memory_space<vmem>>, vector<1x1x8x16xf32>,
    } else {
    }
    %c0_i32_25 = arith.constant 0 : i32
    %46 = arith.cmpi sgt, %arg1, %c0_i32_25 : i32
    %47 = arith.extui %46 : i1 to i32
    %c0_i32_26 = arith.constant 0 : i32
    %48 = arith.cmpi ne, %47, %c0_i32_26 : i32
    scf.if %48 {
      %c0_27 = arith.constant 0 : index
      %c0_28 = arith.constant 0 : index
      %c0_29 = arith.constant 0 : index
      %c0_30 = arith.constant 0 : index
      %49 = vector.load %arg4[%c0_27, %c0_28, %c0_29, %c0_30] : memref<1x4x8x16xf32, #tpu.memory_space<vmem>>, vector<1x1x8x16xf32>
      %50 = vector.shape_cast %49 : vector<1x1x8x16xf32> to vector<8x16xf32>
      %51 = arith.addf %50, %11 : vector<8x16xf32>
      %c0_31 = arith.constant 0 : index
      %c0_32 = arith.constant 0 : index
      %c0_33 = arith.constant 0 : index
      %c0_34 = arith.constant 0 : index
      %52 = vector.load %arg4[%c0_31, %c0_32, %c0_33, %c0_34] : memref<1x4x8x16xf32, #tpu.memory_space<vmem>>, vector<1x1x8x16xf32>
      %53 = vector.shape_cast %52 : vector<1x1x8x16xf32> to vector<8x16xf32>
      %54 = vector.shape_cast %51 : vector<8x16xf32> to vector<1x1x8x16xf32>
      tpu.vector_store %arg4[%c0_31, %c0_32, %c0_33, %c0_34], %54 {strides = array<i32>} : memref<1x4x8x16xf32, #tpu.memory_space<vmem>>, vector<1x1x8x16xf32>,
      %c0_35 = arith.constant 0 : index
      %c1 = arith.constant 1 : index
      %c0_36 = arith.constant 0 : index
      %c0_37 = arith.constant 0 : index
      %55 = vector.load %arg4[%c0_35, %c1, %c0_36, %c0_37] : memref<1x4x8x16xf32, #tpu.memory_space<vmem>>, vector<1x1x8x16xf32>
      %56 = vector.shape_cast %55 : vector<1x1x8x16xf32> to vector<8x16xf32>
      %57 = arith.addf %56, %31 : vector<8x16xf32>
      %c0_38 = arith.constant 0 : index
      %c1_39 = arith.constant 1 : index
      %c0_40 = arith.constant 0 : index
      %c0_41 = arith.constant 0 : index
      %58 = vector.load %arg4[%c0_38, %c1_39, %c0_40, %c0_41] : memref<1x4x8x16xf32, #tpu.memory_space<vmem>>, vector<1x1x8x16xf32>
      %59 = vector.shape_cast %58 : vector<1x1x8x16xf32> to vector<8x16xf32>
      %60 = vector.shape_cast %57 : vector<8x16xf32> to vector<1x1x8x16xf32>
      tpu.vector_store %arg4[%c0_38, %c1_39, %c0_40, %c0_41], %60 {strides = array<i32>} : memref<1x4x8x16xf32, #tpu.memory_space<vmem>>, vector<1x1x8x16xf32>,
      %c0_42 = arith.constant 0 : index
      %c2 = arith.constant 2 : index
      %c0_43 = arith.constant 0 : index
      %c0_44 = arith.constant 0 : index
      %61 = vector.load %arg4[%c0_42, %c2, %c0_43, %c0_44] : memref<1x4x8x16xf32, #tpu.memory_space<vmem>>, vector<1x1x8x16xf32>
      %62 = vector.shape_cast %61 : vector<1x1x8x16xf32> to vector<8x16xf32>
      %63 = arith.addf %62, %33 : vector<8x16xf32>
      %c0_45 = arith.constant 0 : index
      %c2_46 = arith.constant 2 : index
      %c0_47 = arith.constant 0 : index
      %c0_48 = arith.constant 0 : index
      %64 = vector.load %arg4[%c0_45, %c2_46, %c0_47, %c0_48] : memref<1x4x8x16xf32, #tpu.memory_space<vmem>>, vector<1x1x8x16xf32>
      %65 = vector.shape_cast %64 : vector<1x1x8x16xf32> to vector<8x16xf32>
      %66 = vector.shape_cast %63 : vector<8x16xf32> to vector<1x1x8x16xf32>
      tpu.vector_store %arg4[%c0_45, %c2_46, %c0_47, %c0_48], %66 {strides = array<i32>} : memref<1x4x8x16xf32, #tpu.memory_space<vmem>>, vector<1x1x8x16xf32>,
      %c0_49 = arith.constant 0 : index
      %c3 = arith.constant 3 : index
      %c0_50 = arith.constant 0 : index
      %c0_51 = arith.constant 0 : index
      %67 = vector.load %arg4[%c0_49, %c3, %c0_50, %c0_51] : memref<1x4x8x16xf32, #tpu.memory_space<vmem>>, vector<1x1x8x16xf32>
      %68 = vector.shape_cast %67 : vector<1x1x8x16xf32> to vector<8x16xf32>
      %69 = arith.addf %68, %42 : vector<8x16xf32>
      %c0_52 = arith.constant 0 : index
      %c3_53 = arith.constant 3 : index
      %c0_54 = arith.constant 0 : index
      %c0_55 = arith.constant 0 : index
      %70 = vector.load %arg4[%c0_52, %c3_53, %c0_54, %c0_55] : memref<1x4x8x16xf32, #tpu.memory_space<vmem>>, vector<1x1x8x16xf32>
      %71 = vector.shape_cast %70 : vector<1x1x8x16xf32> to vector<8x16xf32>
      %72 = vector.shape_cast %69 : vector<8x16xf32> to vector<1x1x8x16xf32>
      tpu.vector_store %arg4[%c0_52, %c3_53, %c0_54, %c0_55], %72 {strides = array<i32>} : memref<1x4x8x16xf32, #tpu.memory_space<vmem>>, vector<1x1x8x16xf32>,
    } else {
    }
    return
  }
  func.func @transform_0(%arg0: i32, %arg1: i32) -> (i32, i32, i32, i32) {
    %c0_i32 = arith.constant 0 : i32
    %c0_i32_0 = arith.constant 0 : i32
    %c0_i32_1 = arith.constant 0 : i32
    return %arg0, %c0_i32, %arg1, %c0_i32_0 : i32, i32, i32, i32
  }
  func.func @transform_1(%arg0: i32, %arg1: i32) -> (i32, i32, i32, i32) {
    %c0_i32 = arith.constant 0 : i32
    %c0_i32_0 = arith.constant 0 : i32
    %c0_i32_1 = arith.constant 0 : i32
    return %arg0, %c0_i32, %arg1, %c0_i32_0 : i32, i32, i32, i32
  }
  func.func @transform_2(%arg0: i32, %arg1: i32) -> (i32, i32, i32, i32) {
    %c0_i32 = arith.constant 0 : i32
    %c0_i32_0 = arith.constant 0 : i32
    %c0_i32_1 = arith.constant 0 : i32
    %c0_i32_2 = arith.constant 0 : i32
    return %arg0, %c0_i32, %c0_i32_0, %c0_i32_1 : i32, i32, i32, i32
  }
}

</mosaic_0001>

<llo_original>
// kernel: hybrid_loss.1
$region0: #{hybrid_loss.1}
  #allocation0 [shape = 'u32[]', space=smem, size = 0x4, offset = 0x4, fixed_abs, tag = 'smem constant byte address 0x4 - core index']
  #allocation1 [shape = 'u32[72,128]{1,0:T(1,128)}', space=vmem, size = 0x9000, scoped, tag = 'internal scratch']
  #allocation2 [shape = 'f32[4,1,16]{2,1,0:T(1,128)}', space=vmem, size = 0x800, scoped, tag = 'scratch operand']
  %s0 = inlined_call_operand.hbm [shape: f32[2,4,16,16], index: 0, kind: input, shape index: {}]
  %s1 = inlined_call_operand.hbm [shape: f32[2,4,16,16], index: 1, kind: input, shape index: {}]
  %s2 = inlined_call_operand.vmem [shape: f32[2,4,8,16], index: 2, kind: output, shape index: {}]
  %s3 = sld [smem:[#allocation0]]
  $region61: #{hybrid_loss.1} parent=0
    _
  %s5 = ssub.s32 1, %s3
  %s6 = scalar_select 0, %s5, %s3
  $region1: #{hybrid_loss.1} parent=0
    #allocation3 [shape = 'u8[65536]{0}', space=vmem, size = 0x10000, scoped, tag = 'input window, operand 0']
    #allocation4 [shape = 's32[2]{0}', space=sflag, size = 0x8, scoped, tag = 'scoped memory for hybrid_loss.1']
    #allocation5 [shape = 'u8[65536]{0}', space=vmem, size = 0x10000, scoped, tag = 'input window, operand 1']
    #allocation6 [shape = 's32[2]{0}', space=sflag, size = 0x8, scoped, tag = 'scoped memory for hybrid_loss.1']
    %7 = vsyncpa [#allocation4], 0
    %s8 = scalar_lea.sflag [#allocation4], 1
    %9 = vsyncpa %s8, 0
    %10 = vsyncpa [#allocation6], 0
    %s11 = scalar_lea.sflag [#allocation6], 1
    %12 = vsyncpa %s11, 0
    loop: start=0, step=1, limit=4
    $region2: #{hybrid_loss.1} parent=1 // loop_pre_header
      _
    $region3: #{hybrid_loss.1} parent=1 // loop_header
      %s14 = sphi 0, %s18
      %p15 = scmp.ge.s32.totalorder %s14, 4
      %s21 = sphi 0, %s33
      %s22 = sphi 0, %s29
      %s23 = sphi 0, %s21
      %s24 = sphi 0, %s22
      %s25 = sphi 0, %s23
      %s26 = sphi 0, %s24
      %s38 = sphi 0, %s40
      %s41 = sphi 0, %s38
      %s42 = sphi 0, %s41
      %s58 = sphi 0, %s42
      %s66 = sphi 0, %s68
      %s69 = sphi 0, %s66
      %s70 = sphi 0, %s69
      %s86 = sphi 0, %s70
      %s92 = sphi 0, %s94
      %s95 = sphi 0, %s92
      %s96 = sphi 0, %s95
      %s112 = sphi 0, %s96
    $region4: #{hybrid_loss.1} parent=1 // loop_header_branch
      %17 = sbr.rel (%p15) target = $region8
    $region5: #{hybrid_loss.1} parent=1 // loop_body
      %s19 = ssub.s32 %s14, 1
      %s20 = ssub.s32 %s14, 2
      %s27 = sadd.s32 1, %s22
      %p28 = scmp.ge.s32.totalorder %s27, 1
      %s29 = scalar_select %p28, 0, %s27
      %s30 = sadd.s32 1, %s21
      %s31 = scalar_select %p28, %s30, %s21
      %p32 = scmp.ge.s32.totalorder %s31, 2
      %s33 = scalar_select %p32, 0, %s31
      %s34 = ssub.s32 %s21, %s33
      %s35 = ssub.s32 %s22, %s29
      %s36 = sor.u32 %s34, %s35
      %p37 = scmp.eq.s32.totalorder %s36, 0
      %s39 = sadd.s32 %s38, 1
      %s40 = scalar_select %p37, %s38, %s39
      %p43 = pneg %p37
      %p44 = scmp.eq.s32.totalorder %s14, 1
      %p45 = por %p43, %p44
      %p46 = scmp.ne.s32.totalorder %s38, %s41
      %p47 = scmp.eq.s32.totalorder %s14, 0
      %p48 = por %p46, %p47
      %p49 = scmp.ne.s32.totalorder %s38, %s41
      %p50 = scmp.eq.s32.totalorder %s19, 1
      %p51 = por %p49, %p50
      %p52 = scmp.ne.s32.totalorder %s41, %s42
      %p53 = scmp.eq.s32.totalorder %s19, 0
      %p54 = por %p52, %p53
      %p55 = scmp.ne.s32.totalorder %s41, %s42
      %p56 = scmp.eq.s32.totalorder %s20, 1
      %p57 = por %p55, %p56
      %p59 = scmp.ne.s32.totalorder %s42, %s58
      %p60 = scmp.eq.s32.totalorder %s20, 0
      %p61 = por %p59, %p60
      %s62 = ssub.s32 %s21, %s33
      %s63 = ssub.s32 %s22, %s29
      %s64 = sor.u32 %s62, %s63
      %p65 = scmp.eq.s32.totalorder %s64, 0
      %s67 = sadd.s32 %s66, 1
      %s68 = scalar_select %p65, %s66, %s67
      %p71 = pneg %p65
      %p72 = scmp.eq.s32.totalorder %s14, 1
      %p73 = por %p71, %p72
      %p74 = scmp.ne.s32.totalorder %s66, %s69
      %p75 = scmp.eq.s32.totalorder %s14, 0
      %p76 = por %p74, %p75
      %p77 = scmp.ne.s32.totalorder %s66, %s69
      %p78 = scmp.eq.s32.totalorder %s19, 1
      %p79 = por %p77, %p78
      %p80 = scmp.ne.s32.totalorder %s69, %s70
      %p81 = scmp.eq.s32.totalorder %s19, 0
      %p82 = por %p80, %p81
      %p83 = scmp.ne.s32.totalorder %s69, %s70
      %p84 = scmp.eq.s32.totalorder %s20, 1
      %p85 = por %p83, %p84
      %p87 = scmp.ne.s32.totalorder %s70, %s86
      %p88 = scmp.eq.s32.totalorder %s20, 0
      %p89 = por %p87, %p88
      %s90 = ssub.s32 %s21, %s33
      %p91 = scmp.eq.s32.totalorder %s90, 0
      %s93 = sadd.s32 %s92, 1
      %s94 = scalar_select %p91, %s92, %s93
      %p97 = pneg %p91
      %p98 = scmp.eq.s32.totalorder %s14, 1
      %p99 = por %p97, %p98
      %p100 = scmp.ne.s32.totalorder %s92, %s95
      %p101 = scmp.eq.s32.totalorder %s14, 0
      %p102 = por %p100, %p101
      %p103 = scmp.ne.s32.totalorder %s92, %s95
      %p104 = scmp.eq.s32.totalorder %s19, 1
      %p105 = por %p103, %p104
      %p106 = scmp.ne.s32.totalorder %s95, %s96
      %p107 = scmp.eq.s32.totalorder %s19, 0
      %p108 = por %p106, %p107
      %p109 = scmp.ne.s32.totalorder %s95, %s96
      %p110 = scmp.eq.s32.totalorder %s20, 1
      %p111 = por %p109, %p110
      %p113 = scmp.ne.s32.totalorder %s96, %s112
      %p114 = scmp.eq.s32.totalorder %s20, 0
      %p115 = por %p113, %p114
      %p116 = scmp.le.s32.totalorder 1, %s14
      %p117 = scmp.lt.s32.totalorder %s14, 3
      %p118 = pnand %p116, %p117
      %p119 = pneg %p118
      // Predicated region
      $region9: #{hybrid_loss.1} parent=5 // pred_check
        _
      $region10: #{hybrid_loss.1} parent=5 // pred_check_branch
        %121 = sbr.rel (%p118) target = $region12
      $region11: #{hybrid_loss.1} parent=5 // pred_region
        %s122 = ssub.s32 %s14, 1
      $region12: #{hybrid_loss.1} parent=5 // pred_fallthru
        _
      %p123 = scmp.lt.s32.totalorder %s14, 2
      // Predicated region
      $region13: #{hybrid_loss.1} parent=5 // pred_check
        %p124 = pneg %p123
      $region14: #{hybrid_loss.1} parent=5 // pred_check_branch
        %126 = sbr.rel (%p124) target = $region16
      $region15: #{hybrid_loss.1} parent=5 // pred_region
        // Predicated region
        $region17: #{hybrid_loss.1} parent=15 // pred_check
          %p127 = pneg %p48
        $region18: #{hybrid_loss.1} parent=15 // pred_check_branch
          %129 = sbr.rel (%p127) target = $region20
        $region19: #{hybrid_loss.1} parent=15 // pred_region
          %s130 = sand.u32 %s38, 1
          %s131 = scalar_lea.sflag [#allocation4], %s130
          %s132 = sand.u32 %s38, 1
          %s133 = smul.addr %s132, 64
          %s134 = scalar_lea.vmem [#allocation3], %s133
          %s135 = smul.u32 2, %s22
          %137 = vsyncadd %s131, 0
          %s138 = smul.addr %s21, 8
          %s139 = sadd.s32 %s135, %s138
          %s140 = smul.addr %s139, 8
          %s141 = scalar_lea.hbm %s0, %s140
          %s142 = sshll.u32 %s141, 4
          %s143 = int_to_ptr.hbm [resolvable:$true] %s142
          %s144 = sshll.u32 %s134, 4
          %s145 = int_to_ptr.vmem [resolvable:$true] %s144
          %150 = dma.hbm_to_vmem [thread:$0]  %s143, 1024, %s145, %s131, 128, 128, 8
        $region20: #{hybrid_loss.1} parent=15 // pred_fallthru
          _
        // Predicated region
        $region21: #{hybrid_loss.1} parent=15 // pred_check
          %p151 = pneg %p76
        $region22: #{hybrid_loss.1} parent=15 // pred_check_branch
          %153 = sbr.rel (%p151) target = $region24
        $region23: #{hybrid_loss.1} parent=15 // pred_region
          %s154 = sand.u32 %s66, 1
          %s155 = scalar_lea.sflag [#allocation6], %s154
          %s156 = sand.u32 %s66, 1
          %s157 = smul.addr %s156, 64
          %s158 = scalar_lea.vmem [#allocation5], %s157
          %s159 = smul.u32 2, %s22
          %161 = vsyncadd %s155, 0
          %s162 = smul.addr %s21, 8
          %s163 = sadd.s32 %s159, %s162
          %s164 = smul.addr %s163, 8
          %s165 = scalar_lea.hbm %s1, %s164
          %s166 = sshll.u32 %s165, 4
          %s167 = int_to_ptr.hbm [resolvable:$true] %s166
          %s168 = sshll.u32 %s158, 4
          %s169 = int_to_ptr.vmem [resolvable:$true] %s168
          %174 = dma.hbm_to_vmem [thread:$0]  %s167, 1024, %s169, %s155, 128, 128, 8
        $region24: #{hybrid_loss.1} parent=15 // pred_fallthru
          _
      $region16: #{hybrid_loss.1} parent=5 // pred_fallthru
        _
      %p175 = scmp.le.s32.totalorder 1, %s14
      %p176 = scmp.lt.s32.totalorder %s14, 3
      %p177 = pnand %p175, %p176
      %p178 = pneg %p177
      // Predicated region
      $region25: #{hybrid_loss.1} parent=5 // pred_check
        _
      $region26: #{hybrid_loss.1} parent=5 // pred_check_branch
        %180 = sbr.rel (%p177) target = $region28
      $region27: #{hybrid_loss.1} parent=5 // pred_region
        %s181 = ssub.s32 %s14, 1
        %s182 = sand.u32 %s41, 1
        %s183 = scalar_lea.sflag [#allocation4], %s182
        %s184 = sand.u32 %s41, 1
        %s185 = smul.addr %s184, 64
        %s186 = scalar_lea.vmem [#allocation3], %s185
        // Predicated region
        $region29: #{hybrid_loss.1} parent=27 // pred_check
          %p187 = pneg %p54
        $region30: #{hybrid_loss.1} parent=27 // pred_check_branch
          %189 = sbr.rel (%p187) target = $region32
        $region31: #{hybrid_loss.1} parent=27 // pred_region
          %191 = dma.done %s183, 1024
        $region32: #{hybrid_loss.1} parent=27 // pred_fallthru
          _
        %s192 = sand.u32 %s69, 1
        %s193 = scalar_lea.sflag [#allocation6], %s192
        %s194 = sand.u32 %s69, 1
        %s195 = smul.addr %s194, 64
        %s196 = scalar_lea.vmem [#allocation5], %s195
        // Predicated region
        $region33: #{hybrid_loss.1} parent=27 // pred_check
          %p197 = pneg %p82
        $region34: #{hybrid_loss.1} parent=27 // pred_check_branch
          %199 = sbr.rel (%p197) target = $region36
        $region35: #{hybrid_loss.1} parent=27 // pred_region
          %201 = dma.done %s193, 1024
        $region36: #{hybrid_loss.1} parent=27 // pred_fallthru
          _
        %s202 = sand.u32 %s41, 1
        %s203 = scalar_lea.sflag [#allocation4], %s202
        %s204 = sand.u32 %s41, 1
        %s205 = smul.addr %s204, 64
        %s206 = scalar_lea.vmem [#allocation3], %s205
        %p207 = pneg %p54
        %p208 = pneg %p51
        %s209 = sand.u32 %s69, 1
        %s210 = scalar_lea.sflag [#allocation6], %s209
        %s211 = sand.u32 %s69, 1
        %s212 = smul.addr %s211, 64
        %s213 = scalar_lea.vmem [#allocation5], %s212
        %p214 = pneg %p82
        %p215 = pneg %p79
        %p216 = pneg %p108
        %p217 = pneg %p105
        %p218 = scmp.lt.s32.totalorder %s23, 1
        %s219 = scalar_select %p218, %s23, 1
        %s220 = smul.addr %s219, 4
        %s221 = smul.addr %s220, 8
        %s222 = scalar_lea.vmem %s2, %s221
        %s223 = smul.u32 2, %s24
        %s224 = smul.u32 2, %s24
        %p225 = scmp.lt.s32.totalorder %s23, 1
        %s226 = scalar_select %p225, %s23, 1
        %s227 = smul.addr %s226, 4
        %s228 = smul.addr %s227, 8
        %s229 = scalar_lea.vmem %s2, %s228
        %v230 = vld [vmem:[%s186] sm:$0xff]
        %v231 = vld [vmem:[%s186 + $0x8] sm:$0xff]
        %v232 = vld [vmem:[%s186 + $0x10] sm:$0xff]
        %v233 = vld [vmem:[%s186 + $0x18] sm:$0xff]
        %v234 = vld [vmem:[%s186 + $0x20] sm:$0xff]
        %v235 = vld [vmem:[%s186 + $0x28] sm:$0xff]
        %v236 = vld [vmem:[%s186 + $0x30] sm:$0xff]
        %v237 = vld [vmem:[%s186 + $0x38] sm:$0xff]
        %v238 = vld [vmem:[%s196] sm:$0xff]
        %v239 = vld [vmem:[%s196 + $0x8] sm:$0xff]
        %v240 = vld [vmem:[%s196 + $0x10] sm:$0xff]
        %v241 = vld [vmem:[%s196 + $0x18] sm:$0xff]
        %v242 = vld [vmem:[%s196 + $0x20] sm:$0xff]
        %v243 = vld [vmem:[%s196 + $0x28] sm:$0xff]
        %v244 = vld [vmem:[%s196 + $0x30] sm:$0xff]
        %v245 = vld [vmem:[%s196 + $0x38] sm:$0xff]
        %p246 = scmp.eq.s32.totalorder %s24, 0
        // Predicated region
        $region37: #{hybrid_loss.1} parent=27 // pred_check
          %p247 = pneg %p246
        $region38: #{hybrid_loss.1} parent=27 // pred_check_branch
          %249 = sbr.rel (%p247) target = $region40
        $region39: #{hybrid_loss.1} parent=27 // pred_region
          %vm250 = vcmask 122880
          %251 = vst.msk [vmem:[#allocation2] sm:$0x1] %vm250, %v230
          %252 = vst.msk [vmem:[#allocation2 + $0x1] sm:$0x1] %vm250, %v232
          %253 = vst.msk [vmem:[#allocation2 + $0x2] sm:$0x1] %vm250, %v234
          %254 = vst.msk [vmem:[#allocation2 + $0x3] sm:$0x1] %vm250, %v236
        $region40: #{hybrid_loss.1} parent=27 // pred_fallthru
          _
        %v255 = vsub.f32 %v230, %v238
        %v256 = vsub.f32 %v231, %v239
        %v257 = vsub.f32 %v232, %v240
        %v258 = vsub.f32 %v233, %v241
        %v259 = vsub.f32 %v234, %v242
        %v260 = vsub.f32 %v235, %v243
        %v261 = vsub.f32 %v236, %v244
        %v262 = vsub.f32 %v237, %v245
        %v263 = vand.u32 2147483647, %v255
        %v264 = vand.u32 2147483647, %v256
        %v265 = vand.u32 2147483647, %v257
        %v266 = vand.u32 2147483647, %v258
        %v267 = vand.u32 2147483647, %v259
        %v268 = vand.u32 2147483647, %v260
        %v269 = vand.u32 2147483647, %v261
        %v270 = vand.u32 2147483647, %v262
        %vm271 = vcmask 130048
        %v272 = vsel %vm271, %v263, 0.0
        %v273 = vsel %vm271, %v265, 0.0
        %v274 = vadd.f32 %v272, %v273
        %v275 = vsel %vm271, %v267, 0.0
        %v276 = vadd.f32 %v274, %v275
        %v277 = vsel %vm271, %v269, 0.0
        %v278 = vadd.f32 %v276, %v277
        %v279 = vsel %vm271, %v264, 0.0
        %v280 = vsel %vm271, %v266, 0.0
        %v281 = vadd.f32 %v279, %v280
        %v282 = vsel %vm271, %v268, 0.0
        %v283 = vadd.f32 %v281, %v282
        %v284 = vsel %vm271, %v270, 0.0
        %v285 = vadd.f32 %v283, %v284
        %v286 = vsel %vm271, %v278, 0.0
        %v287 = vsel %vm271, %v285, 0.0
        %v288 = vadd.f32 %v286, %v287
        %v289 = vld [vmem:[#allocation2] sm:$0x1]
        %v290 = vld [vmem:[#allocation2 + $0x1] sm:$0x1]
        %v291 = vld [vmem:[#allocation2 + $0x2] sm:$0x1]
        %v292 = vld [vmem:[#allocation2 + $0x3] sm:$0x1]
        %v293 = vsub.f32 %v230, %v289
        %v294 = vsub.f32 %v232, %v290
        %v295 = vsub.f32 %v234, %v291
        %v296 = vsub.f32 %v236, %v292
        %v297 = vmul.f32 %v293, %v293
        %v298 = vmul.f32 %v294, %v294
        %v299 = vmul.f32 %v295, %v295
        %v300 = vmul.f32 %v296, %v296
        %vm301 = vcmask 122880
        %v302 = vsel %vm301, %v297, 0.0
        %v303 = vsel %vm301, %v298, 0.0
        %v304 = vadd.f32 %v302, %v303
        %v305 = vsel %vm301, %v299, 0.0
        %v306 = vadd.f32 %v304, %v305
        %v307 = vsel %vm301, %v300, 0.0
        %v308 = vadd.f32 %v306, %v307
        %vm317 = vcmask 1040384
        %v318 = vrot.slane %v230, 7
        %v319 = vrot.slane %v231, 7
        %v320 = vsel %vm317, %v318, %v319
        %v321 = vrot.slane %v232, 7
        %v322 = vrot.slane %v233, 7
        %v323 = vsel %vm317, %v321, %v322
        %v324 = vrot.slane %v234, 7
        %v325 = vrot.slane %v235, 7
        %v326 = vsel %vm317, %v324, %v325
        %v327 = vrot.slane %v236, 7
        %v328 = vrot.slane %v237, 7
        %v329 = vsel %vm317, %v327, %v328
        %v338 = vsub.f32 %v230, %v318
        %v339 = vsub.f32 %v231, %v320
        %v340 = vsub.f32 %v232, %v321
        %v341 = vsub.f32 %v233, %v323
        %v342 = vsub.f32 %v234, %v324
        %v343 = vsub.f32 %v235, %v326
        %v344 = vsub.f32 %v236, %v327
        %v345 = vsub.f32 %v237, %v329
        %v346 = vmul.f32 %v338, %v338
        %v347 = vmul.f32 %v339, %v339
        %v348 = vmul.f32 %v340, %v340
        %v349 = vmul.f32 %v341, %v341
        %v350 = vmul.f32 %v342, %v342
        %v351 = vmul.f32 %v343, %v343
        %v352 = vmul.f32 %v344, %v344
        %v353 = vmul.f32 %v345, %v345
        %vm354 = vcmask 130049
        %v355 = vsel %vm354, %v346, 0.0
        %v356 = vsel %vm354, %v348, 0.0
        %v357 = vadd.f32 %v355, %v356
        %v358 = vsel %vm354, %v350, 0.0
        %v359 = vadd.f32 %v357, %v358
        %v360 = vsel %vm354, %v352, 0.0
        %v361 = vadd.f32 %v359, %v360
        %v362 = vsel %vm271, %v347, 0.0
        %v363 = vsel %vm271, %v349, 0.0
        %v364 = vadd.f32 %v362, %v363
        %v365 = vsel %vm271, %v351, 0.0
        %v366 = vadd.f32 %v364, %v365
        %v367 = vsel %vm271, %v353, 0.0
        %v368 = vadd.f32 %v366, %v367
        %v369 = vsel %vm317, %v308, %v361
        %370 = vrot.lane.b32.xlu0 %v230, 1
        %v371 = vpop.permute.xlu0 %370
        %372 = vrot.lane.b32.xlu0 %v231, 1
        %v373 = vpop.permute.xlu0 %372
        %374 = vrot.lane.b32.xlu0 %v232, 1
        %v375 = vpop.permute.xlu0 %374
        %376 = vrot.lane.b32.xlu0 %v233, 1
        %v377 = vpop.permute.xlu0 %376
        %378 = vrot.lane.b32.xlu0 %v234, 1
        %v379 = vpop.permute.xlu0 %378
        %380 = vrot.lane.b32.xlu0 %v235, 1
        %v381 = vpop.permute.xlu0 %380
        %382 = vrot.lane.b32.xlu0 %v236, 1
        %v383 = vpop.permute.xlu0 %382
        %384 = vrot.lane.b32.xlu0 %v237, 1
        %v385 = vpop.permute.xlu0 %384
        %v394 = vsub.f32 %v230, %v371
        %v395 = vsub.f32 %v231, %v373
        %v396 = vsub.f32 %v232, %v375
        %v397 = vsub.f32 %v233, %v377
        %v398 = vsub.f32 %v234, %v379
        %v399 = vsub.f32 %v235, %v381
        %v400 = vsub.f32 %v236, %v383
        %v401 = vsub.f32 %v237, %v385
        %v402 = vmul.f32 %v394, %v394
        %v403 = vmul.f32 %v395, %v395
        %v404 = vmul.f32 %v396, %v396
        %v405 = vmul.f32 %v397, %v397
        %v406 = vmul.f32 %v398, %v398
        %v407 = vmul.f32 %v399, %v399
        %v408 = vmul.f32 %v400, %v400
        %v409 = vmul.f32 %v401, %v401
        %vm410 = vcmask 130056
        %v411 = vsel %vm410, %v402, 0.0
        %v412 = vsel %vm410, %v404, 0.0
        %v413 = vadd.f32 %v411, %v412
        %v414 = vsel %vm410, %v406, 0.0
        %v415 = vadd.f32 %v413, %v414
        %v416 = vsel %vm410, %v408, 0.0
        %v417 = vadd.f32 %v415, %v416
        %v418 = vsel %vm410, %v403, 0.0
        %v419 = vsel %vm410, %v405, 0.0
        %v420 = vadd.f32 %v418, %v419
        %v421 = vsel %vm410, %v407, 0.0
        %v422 = vadd.f32 %v420, %v421
        %v423 = vsel %vm410, %v409, 0.0
        %v424 = vadd.f32 %v422, %v423
        %vm425 = vcmask 7168
        %v426 = vsel %vm425, 0.0, %v417
        %v427 = vsel %vm425, 0.0, %v424
        %v428 = vsel %vm271, %v369, 0.0
        %v429 = vsel %vm271, %v368, 0.0
        %v430 = vadd.f32 %v428, %v429
        %v431 = vsel %vm271, %v426, 0.0
        %v432 = vsel %vm271, %v427, 0.0
        %v433 = vadd.f32 %v431, %v432
        %vm434 = vcmask 130055
        %435 = vst.msk [vmem:[#allocation2 - $0x7] sm:$0x80] %vm434, %v231
        %436 = vst.msk [vmem:[#allocation2 - $0x6] sm:$0x80] %vm434, %v233
        %437 = vst.msk [vmem:[#allocation2 - $0x5] sm:$0x80] %vm434, %v235
        %438 = vst.msk [vmem:[#allocation2 - $0x4] sm:$0x80] %vm434, %v237
        %v439 = vsub.f32 %v232, %v230
        %v440 = vsub.f32 %v233, %v231
        %v441 = vsub.f32 %v234, %v232
        %v442 = vsub.f32 %v235, %v233
        %v443 = vsub.f32 %v236, %v234
        %v444 = vsub.f32 %v237, %v235
        %v445 = vmul.f32 %v439, %v439
        %v446 = vmul.f32 %v440, %v440
        %v447 = vmul.f32 %v441, %v441
        %v448 = vmul.f32 %v442, %v442
        %v449 = vmul.f32 %v443, %v443
        %v450 = vmul.f32 %v444, %v444
        %v451 = vsel %vm271, %v445, 0.0
        %v452 = vsel %vm271, %v447, 0.0
        %v453 = vadd.f32 %v451, %v452
        %v454 = vsel %vm271, %v449, 0.0
        %v455 = vadd.f32 %v453, %v454
        %v456 = vsel %vm271, %v446, 0.0
        %v457 = vsel %vm271, %v448, 0.0
        %v458 = vadd.f32 %v456, %v457
        %v459 = vsel %vm271, %v450, 0.0
        %v460 = vadd.f32 %v458, %v459
        %v461 = vsel %vm271, %v455, 0.0
        %v462 = vsel %vm271, %v460, 0.0
        %v463 = vadd.f32 %v461, %v462
        // Predicated region
        $region41: #{hybrid_loss.1} parent=27 // pred_check
          %p464 = pneg %p246
        $region42: #{hybrid_loss.1} parent=27 // pred_check_branch
          %466 = sbr.rel (%p464) target = $region44
        $region43: #{hybrid_loss.1} parent=27 // pred_region
          %467 = vst.msk [vmem:[%s229] sm:$0xff] %vm271, %v288
          %s468 = scalar_lea.vmem %s229, 8
          %469 = vst.msk [vmem:[%s468] sm:$0xff] %vm271, %v430
          %s470 = scalar_lea.vmem %s229, 16
          %471 = vst.msk [vmem:[%s470] sm:$0xff] %vm271, %v433
          %s472 = scalar_lea.vmem %s229, 24
          %473 = vst.msk [vmem:[%s472] sm:$0xff] %vm271, %v463
        $region44: #{hybrid_loss.1} parent=27 // pred_fallthru
          _
        %p474 = scmp.gt.s32.totalorder %s24, 0
        // Predicated region
        $region45: #{hybrid_loss.1} parent=27 // pred_check
          %p475 = pneg %p474
        $region46: #{hybrid_loss.1} parent=27 // pred_check_branch
          %477 = sbr.rel (%p475) target = $region48
        $region47: #{hybrid_loss.1} parent=27 // pred_region
          %v478 = vld [vmem:[%s229] sm:$0xff]
          %v479 = vadd.f32 %v478, %v288
          %480 = vst.msk [vmem:[%s229] sm:$0xff] %vm271, %v479
          %s481 = scalar_lea.vmem %s229, 8
          %v482 = vld [vmem:[%s481] sm:$0xff]
          %v483 = vadd.f32 %v482, %v430
          %484 = vst.msk [vmem:[%s481] sm:$0xff] %vm271, %v483
          %s485 = scalar_lea.vmem %s229, 16
          %v486 = vld [vmem:[%s485] sm:$0xff]
          %v487 = vadd.f32 %v486, %v433
          %488 = vst.msk [vmem:[%s485] sm:$0xff] %vm271, %v487
          %s489 = scalar_lea.vmem %s229, 24
          %v490 = vld [vmem:[%s489] sm:$0xff]
          %v491 = vadd.f32 %v490, %v463
          %492 = vst.msk [vmem:[%s489] sm:$0xff] %vm271, %v491
        $region48: #{hybrid_loss.1} parent=27 // pred_fallthru
          _
        %p493 = scmp.lt.s32.totalorder %s23, 1
        %s494 = scalar_select %p493, %s23, 1
        %s495 = smul.addr %s494, 4
        %s496 = smul.addr %s495, 8
        %s497 = scalar_lea.vmem %s2, %s496
        // Predicated region
        $region49: #{hybrid_loss.1} parent=27 // pred_check
          %p498 = pneg %p105
        $region50: #{hybrid_loss.1} parent=27 // pred_check_branch
          %500 = sbr.rel (%p498) target = $region52
        $region51: #{hybrid_loss.1} parent=27 // pred_region
          _
        $region52: #{hybrid_loss.1} parent=27 // pred_fallthru
          _
      $region28: #{hybrid_loss.1} parent=5 // pred_fallthru
        _
      %p501 = scmp.le.s32.totalorder 2, %s14
      // Predicated region
      $region53: #{hybrid_loss.1} parent=5 // pred_check
        %p502 = pneg %p501
      $region54: #{hybrid_loss.1} parent=5 // pred_check_branch
        %504 = sbr.rel (%p502) target = $region56
      $region55: #{hybrid_loss.1} parent=5 // pred_region
        %s505 = ssub.s32 %s14, 2
        // Predicated region
        $region57: #{hybrid_loss.1} parent=55 // pred_check
          %p506 = pneg %p111
        $region58: #{hybrid_loss.1} parent=55 // pred_check_branch
          %508 = sbr.rel (%p506) target = $region60
        $region59: #{hybrid_loss.1} parent=55 // pred_region
          %p509 = scmp.lt.s32.totalorder %s25, 1
          %s510 = scalar_select %p509, %s25, 1
          %s511 = smul.addr %s510, 4
          %s512 = smul.addr %s511, 8
          %s513 = scalar_lea.vmem %s2, %s512
        $region60: #{hybrid_loss.1} parent=55 // pred_fallthru
          _
      $region56: #{hybrid_loss.1} parent=5 // pred_fallthru
        _
    $region6: #{hybrid_loss.1} parent=1 // loop_footer
      %s18 = sadd.s32 1, %s14
    $region7: #{hybrid_loss.1} parent=1 // loop_footer_branch
      %13 = sbr.rel target = $region3
    $region8: #{hybrid_loss.1} parent=1 // loop_exit
      _
    %514 = vsyncpa [#allocation4], 1
    %s515 = scalar_lea.sflag [#allocation4], 1
    %516 = vsyncpa %s515, 1
    %517 = vsyncpa [#allocation6], 1
    %s518 = scalar_lea.sflag [#allocation6], 1
    %519 = vsyncpa %s518, 1

</llo_original>
